<compile_context>
chip_gen: v7x
topology: tpu7x:2x2x1
jax: 0.10.0
libtpu: 0.0.40
codegen_flags: <defaults>
</compile_context>

<pallas_src>
import functools

import jax
import jax.numpy as jnp
from jax import lax
from jax.experimental import pallas as pl
from jax.experimental.pallas import tpu as pltpu


def _round_up(x, k):
    return ((x + k - 1) // k) * k


def _chip_kind():
    try:
        return jax.devices()[0].device_kind.lower()
    except Exception:
        return ""


def _batch_tile_policy(B):
    """Chip-aware (TB, B_pad): split across >=2 tiles on v7x (2 TensorCores),
    grow toward 256-row tiles on v6e (256-wide MXU), else 128-row tiles."""
    kind = _chip_kind()
    if "v7" in kind:
        tb_cap, want_tiles = 128, 2
    elif "v6" in kind:
        tb_cap, want_tiles = 256, 1
    else:  # v5e and default
        tb_cap, want_tiles = 128, 1
    b_pad = _round_up(max(B, 1), 8)
    tiles = max(want_tiles, -(-b_pad // tb_cap))          # ceil div
    tb = min(_round_up(-(-b_pad // tiles), 8), tb_cap)    # balanced tile, 8-aligned
    b_pad = _round_up(b_pad, tb)
    return tb, b_pad


def _vmem_limit_bytes(TB, n_pad, num_iter, st_bufs):
    """Scoped VMEM sized from the real block footprint (+slack), with a
    generation-appropriate ceiling."""
    need = 4 * (2 * TB * n_pad                # wy tile, double-buffered
                + st_bufs * n_pad * n_pad     # S^T block
                + 2 * num_iter * TB * n_pad)  # output slab, double-buffered
    limit = max(need + (4 << 20), 32 << 20)
    ceiling = (56 << 20) if "v7" in _chip_kind() else (100 << 20)
    return int(min(limit, ceiling))


def _lista_kernel(num_iter, unroll, wy_ref, st_ref, thr_ref, out_ref):
    """Runs all `num_iter` LISTA iterations for one batch tile."""
    thr = thr_ref[0, 0]            # scalar from SMEM, read once
    wy = wy_ref[...]               # (TB, n_pad), constant across iterations
    st = st_ref[...]               # (n_pad, n_pad)

    # Hoisted +/- thr shifts of wy: replaces per-iteration thr broadcasts
    # (JAX does not CSE broadcast_in_dim across unrolled iterations) and
    # drops one VPU op per element from the soft-threshold.
    wy_lo = wy - thr
    wy_hi = wy + thr

    # Peeled iteration 0: d == 0, so the (TB x n x n) matmul is skipped.
    # soft_thr(x, thr) = relu(x - thr) - relu(-x - thr)
    #                  = max(x - thr, 0) + min(x + thr, 0)
    d0 = jnp.maximum(wy_lo, 0.0) + jnp.minimum(wy_hi, 0.0)
    out_ref[0] = d0.astype(out_ref.dtype)

    def body(t, d):
        dot = jnp.dot(d, st, preferred_element_type=jnp.float32)
        d_new = jnp.maximum(wy_lo + dot, 0.0) + jnp.minimum(wy_hi + dot, 0.0)
        out_ref[t] = d_new.astype(out_ref.dtype)
        return d_new

    lax.fori_loop(1, num_iter, body, d0, unroll=unroll)


@functools.partial(jax.jit, static_argnames=("num_iter", "single_buffer_st"))
def _lista_forward_impl(y, diag, w_t, s_t, thr, num_iter, single_buffer_st):
    B, m = y.shape
    n = w_t.shape[1]

    # One-off work hoisted out of the kernel: wy = (y * diag) @ W^T.
    wy = (y * diag[None, :]) @ w_t                         # (B, n)

    n_pad = _round_up(n, 128)
    TB, B_pad = _batch_tile_policy(B)
    num_tiles = B_pad // TB

    # Zero padding: padded rows/cols of S^T are zero, so padded coordinates
    # never contaminate real ones; padded batch rows are sliced off below.
    wy_pad = jnp.zeros((B_pad, n_pad), jnp.float32).at[:B, :n].set(
        wy.astype(jnp.float32))
    st_pad = jnp.zeros((n_pad, n_pad), jnp.float32).at[:n, :n].set(
        s_t.astype(jnp.float32))
    thr_s = jnp.asarray(thr, jnp.float32).reshape(1, 1)

    st_spec_kwargs = {}
    if single_buffer_st:
        # Invariant block (constant index map): the second pipeline buffer
        # would be dead VMEM, so request a single buffer.
        st_spec_kwargs["pipeline_mode"] = pl.Buffered(1)

    unroll = max(1, min(num_iter - 1, 8))   # bounded unroll: LLO visibility
                                            # without blowing vreg live ranges

    out = pl.pallas_call(
        functools.partial(_lista_kernel, num_iter, unroll),
        out_shape=jax.ShapeDtypeStruct((num_iter, B_pad, n_pad), jnp.float32),
        grid=(num_tiles,),
        in_specs=[
            pl.BlockSpec((TB, n_pad), lambda b: (b, 0)),           # wy tile
            pl.BlockSpec((n_pad, n_pad), lambda b: (0, 0),         # S^T (whole)
                         **st_spec_kwargs),
            pl.BlockSpec(memory_space=pltpu.MemorySpace.SMEM),     # thr scalar
        ],
        out_specs=pl.BlockSpec((num_iter, TB, n_pad), lambda b: (0, b, 0)),
        compiler_params=pltpu.CompilerParams(
            dimension_semantics=("parallel",),   # batch tiles are independent
            vmem_limit_bytes=_vmem_limit_bytes(
                TB, n_pad, num_iter, 1 if single_buffer_st else 2),
        ),
    )(wy_pad, st_pad, thr_s)

    return out[:, :B, :n]


def lista_forward(y, diag, w_t, s_t, thr, num_iter):
    """y: (B, m) f32; w_t = W.weight.T (m, n); s_t = S.weight.T (n, n).

    Returns stacked (num_iter, B, n) f32 (one slice per LISTA iteration)."""
    try:
        return _lista_forward_impl(y, diag, w_t, s_t, thr,
                                   num_iter=num_iter, single_buffer_st=True)
    except Exception:
        # pl.Buffered(1) not accepted by this jax/libtpu combination:
        # fall back to default double buffering (correctness identical).
        return _lista_forward_impl(y, diag, w_t, s_t, thr,
                                   num_iter=num_iter, single_buffer_st=False)


def lista_reference(y, diag, w_t, s_t, thr, num_iter):
    """Pure-JAX reference matching the PyTorch forward."""
    yc = y * diag[None, :]
    wy = yc @ w_t
    d = jnp.zeros((y.shape[0], w_t.shape[1]), jnp.float32)
    outs = []
    for _ in range(num_iter):
        x = wy + d @ s_t
        d = jnp.maximum(x - thr, 0.0) - jnp.maximum(-x - thr, 0.0)
        outs.append(d)
    return jnp.stack(outs, axis=0)


def _make_problem(key, m, n):
    """Parameters exactly as LISTA.__init__/_initialize_weights."""
    A = jax.random.normal(key, (m, n), dtype=jnp.float32) / jnp.sqrt(m)
    L = float(jnp.max(jnp.linalg.eigvalsh(A.T @ A)))        # Lipschitz of A^T A
    W_weight = (1.0 / L) * A.T                               # (n, m)
    S_weight = jnp.eye(n, dtype=jnp.float32) - (1.0 / L) * (A.T @ A)  # (n, n)
    w_t = W_weight.T                                         # (m, n)
    s_t = S_weight.T                                         # (n, n)
    thr = jnp.full((1, 1), 0.1 / L, dtype=jnp.float32)
    diag = jnp.ones((m,), dtype=jnp.float32)
    return w_t, s_t, thr, diag


if __name__ == "__main__":
    key = jax.random.PRNGKey(0)
    k1, k2, k3, k4, k5, k6 = jax.random.split(key, 6)

    # Case 1: lane-dense shapes (n multiple of 128).
    m, n, num_iter, batch = 16, 128, 5, 8
    w_t, s_t, thr, diag = _make_problem(k1, m, n)
    y = jax.random.normal(k2, (batch, m), dtype=jnp.float32)

    out = jax.block_until_ready(lista_forward(y, diag, w_t, s_t, thr, num_iter))
    outputs = [out[i] for i in range(num_iter)]   # per-iteration list, like PyTorch
    ref = lista_reference(y, diag, w_t, s_t, thr, num_iter)
    assert out.shape == (num_iter, batch, n)
    assert jnp.allclose(out, ref, atol=1e-4, rtol=1e-4), "mismatch vs reference (case 1)"

    # Case 2: small / unaligned shapes (exercises the padding path).
    m2, n2, num_iter2, batch2 = 16, 32, 4, 3
    w_t2, s_t2, thr2, diag2 = _make_problem(k3, m2, n2)
    y2 = jax.random.normal(k4, (batch2, m2), dtype=jnp.float32)

    out2 = jax.block_until_ready(
        lista_forward(y2, diag2, w_t2, s_t2, thr2, num_iter2))
    ref2 = lista_reference(y2, diag2, w_t2, s_t2, thr2, num_iter2)
    assert out2.shape == (num_iter2, batch2, n2)
    assert jnp.allclose(out2, ref2, atol=1e-4, rtol=1e-4), "mismatch vs reference (case 2)"

    # Case 3: batch > 128 (exercises the multi-tile grid + padded batch rows).
    m3, n3, num_iter3, batch3 = 16, 128, 3, 136
    w_t3, s_t3, thr3, diag3 = _make_problem(k5, m3, n3)
    y3 = jax.random.normal(k6, (batch3, m3), dtype=jnp.float32)

    out3 = jax.block_until_ready(
        lista_forward(y3, diag3, w_t3, s_t3, thr3, num_iter3))
    ref3 = lista_reference(y3, diag3, w_t3, s_t3, thr3, num_iter3)
    assert out3.shape == (num_iter3, batch3, n3)
    assert jnp.allclose(out3, ref3, atol=1e-4, rtol=1e-4), "mismatch vs reference (case 3)"

    print("KERNEL_OK")
</pallas_src>

<mosaic_0001>
module attributes {stable_mosaic.version = 11 : i64} {
  func.func @_lista_kernel(%arg0: i32, %arg1: memref<8x128xf32, #tpu.memory_space<vmem>>, %arg2: memref<128x128xf32, #tpu.memory_space<vmem>>, %arg3: memref<1x1xf32, #tpu.memory_space<smem>>, %arg4: memref<5x8x128xf32, #tpu.memory_space<vmem>>) attributes {dimension_semantics = [#tpu.dimension_semantics<parallel>], iteration_bounds = array<i64: 1>, scalar_prefetch = 0 : i64, scratch_operands = 0 : i64, tpu.core_type = #tpu.core_type<tc>, window_params = [{transform_indices = @transform_0, window_bounds = array<i64: 8, 128>}, {pipeline_mode = #tpu.pipeline_mode<synchronous>, transform_indices = @transform_1, window_bounds = array<i64: 128, 128>}, {transform_indices = @transform_2, window_bounds = array<i64: 1, 1>}, {transform_indices = @transform_3, window_bounds = array<i64: 5, 8, 128>}]} {
    %c0 = arith.constant 0 : index
    %c0_0 = arith.constant 0 : index
    %0 = memref.load %arg3[%c0, %c0_0] : memref<1x1xf32, #tpu.memory_space<smem>>
    %c0_1 = arith.constant 0 : index
    %c0_2 = arith.constant 0 : index
    %1 = vector.load %arg1[%c0_1, %c0_2] : memref<8x128xf32, #tpu.memory_space<vmem>>, vector<8x128xf32>
    %c0_3 = arith.constant 0 : index
    %c0_4 = arith.constant 0 : index
    %2 = vector.load %arg2[%c0_3, %c0_4] : memref<128x128xf32, #tpu.memory_space<vmem>>, vector<128x128xf32>
    %3 = vector.broadcast %0 : f32 to vector<8x128xf32>
    %4 = arith.subf %1, %3 : vector<8x128xf32>
    %5 = vector.broadcast %0 : f32 to vector<8x128xf32>
    %6 = arith.addf %1, %5 : vector<8x128xf32>
    %cst = arith.constant 0.000000e+00 : f32
    %7 = vector.broadcast %cst : f32 to vector<8x128xf32>
    %8 = arith.maximumf %4, %7 : vector<8x128xf32>
    %cst_5 = arith.constant 0.000000e+00 : f32
    %9 = vector.broadcast %cst_5 : f32 to vector<8x128xf32>
    %10 = arith.minimumf %6, %9 : vector<8x128xf32>
    %11 = arith.addf %8, %10 : vector<8x128xf32>
    %c0_6 = arith.constant 0 : index
    %c0_7 = arith.constant 0 : index
    %c0_8 = arith.constant 0 : index
    %12 = vector.load %arg4[%c0_6, %c0_7, %c0_8] : memref<5x8x128xf32, #tpu.memory_space<vmem>>, vector<1x8x128xf32>
    %13 = vector.shape_cast %12 : vector<1x8x128xf32> to vector<8x128xf32>
    %14 = vector.shape_cast %11 : vector<8x128xf32> to vector<1x8x128xf32>
    tpu.vector_store %arg4[%c0_6, %c0_7, %c0_8], %14 {strides = array<i32>} : memref<5x8x128xf32, #tpu.memory_space<vmem>>, vector<1x8x128xf32>,
    %c1_i32 = arith.constant 1 : i32
    %cst_9 = arith.constant dense<0.000000e+00> : vector<8x128xf32>
    %15 = tpu.matmul %11, %2, %cst_9 {dimension_numbers = #tpu.dot_dimension_numbers<[1], [0], [0], [1], [0, 0, 1, 1], [], []>} : vector<8x128xf32>, vector<128x128xf32>, vector<8x128xf32> -> vector<8x128xf32>
    %16 = arith.addf %4, %15 : vector<8x128xf32>
    %cst_10 = arith.constant 0.000000e+00 : f32
    %17 = vector.broadcast %cst_10 : f32 to vector<8x128xf32>
    %18 = arith.maximumf %16, %17 : vector<8x128xf32>
    %19 = arith.addf %6, %15 : vector<8x128xf32>
    %cst_11 = arith.constant 0.000000e+00 : f32
    %20 = vector.broadcast %cst_11 : f32 to vector<8x128xf32>
    %21 = arith.minimumf %19, %20 : vector<8x128xf32>
    %22 = arith.addf %18, %21 : vector<8x128xf32>
    %23 = arith.index_cast %c1_i32 : i32 to index
    %c0_12 = arith.constant 0 : index
    %c0_13 = arith.constant 0 : index
    %24 = vector.load %arg4[%23, %c0_12, %c0_13] : memref<5x8x128xf32, #tpu.memory_space<vmem>>, vector<1x8x128xf32>
    %25 = vector.shape_cast %24 : vector<1x8x128xf32> to vector<8x128xf32>
    %26 = vector.shape_cast %22 : vector<8x128xf32> to vector<1x8x128xf32>
    tpu.vector_store %arg4[%23, %c0_12, %c0_13], %26 {strides = array<i32>} : memref<5x8x128xf32, #tpu.memory_space<vmem>>, vector<1x8x128xf32>,
    %c2_i32 = arith.constant 2 : i32
    %cst_14 = arith.constant dense<0.000000e+00> : vector<8x128xf32>
    %27 = tpu.matmul %22, %2, %cst_14 {dimension_numbers = #tpu.dot_dimension_numbers<[1], [0], [0], [1], [0, 0, 1, 1], [], []>} : vector<8x128xf32>, vector<128x128xf32>, vector<8x128xf32> -> vector<8x128xf32>
    %28 = arith.addf %4, %27 : vector<8x128xf32>
    %cst_15 = arith.constant 0.000000e+00 : f32
    %29 = vector.broadcast %cst_15 : f32 to vector<8x128xf32>
    %30 = arith.maximumf %28, %29 : vector<8x128xf32>
    %31 = arith.addf %6, %27 : vector<8x128xf32>
    %cst_16 = arith.constant 0.000000e+00 : f32
    %32 = vector.broadcast %cst_16 : f32 to vector<8x128xf32>
    %33 = arith.minimumf %31, %32 : vector<8x128xf32>
    %34 = arith.addf %30, %33 : vector<8x128xf32>
    %35 = arith.index_cast %c2_i32 : i32 to index
    %c0_17 = arith.constant 0 : index
    %c0_18 = arith.constant 0 : index
    %36 = vector.load %arg4[%35, %c0_17, %c0_18] : memref<5x8x128xf32, #tpu.memory_space<vmem>>, vector<1x8x128xf32>
    %37 = vector.shape_cast %36 : vector<1x8x128xf32> to vector<8x128xf32>
    %38 = vector.shape_cast %34 : vector<8x128xf32> to vector<1x8x128xf32>
    tpu.vector_store %arg4[%35, %c0_17, %c0_18], %38 {strides = array<i32>} : memref<5x8x128xf32, #tpu.memory_space<vmem>>, vector<1x8x128xf32>,
    %c3_i32 = arith.constant 3 : i32
    %cst_19 = arith.constant dense<0.000000e+00> : vector<8x128xf32>
    %39 = tpu.matmul %34, %2, %cst_19 {dimension_numbers = #tpu.dot_dimension_numbers<[1], [0], [0], [1], [0, 0, 1, 1], [], []>} : vector<8x128xf32>, vector<128x128xf32>, vector<8x128xf32> -> vector<8x128xf32>
    %40 = arith.addf %4, %39 : vector<8x128xf32>
    %cst_20 = arith.constant 0.000000e+00 : f32
    %41 = vector.broadcast %cst_20 : f32 to vector<8x128xf32>
    %42 = arith.maximumf %40, %41 : vector<8x128xf32>
    %43 = arith.addf %6, %39 : vector<8x128xf32>
    %cst_21 = arith.constant 0.000000e+00 : f32
    %44 = vector.broadcast %cst_21 : f32 to vector<8x128xf32>
    %45 = arith.minimumf %43, %44 : vector<8x128xf32>
    %46 = arith.addf %42, %45 : vector<8x128xf32>
    %47 = arith.index_cast %c3_i32 : i32 to index
    %c0_22 = arith.constant 0 : index
    %c0_23 = arith.constant 0 : index
    %48 = vector.load %arg4[%47, %c0_22, %c0_23] : memref<5x8x128xf32, #tpu.memory_space<vmem>>, vector<1x8x128xf32>
    %49 = vector.shape_cast %48 : vector<1x8x128xf32> to vector<8x128xf32>
    %50 = vector.shape_cast %46 : vector<8x128xf32> to vector<1x8x128xf32>
    tpu.vector_store %arg4[%47, %c0_22, %c0_23], %50 {strides = array<i32>} : memref<5x8x128xf32, #tpu.memory_space<vmem>>, vector<1x8x128xf32>,
    %c4_i32 = arith.constant 4 : i32
    %cst_24 = arith.constant dense<0.000000e+00> : vector<8x128xf32>
    %51 = tpu.matmul %46, %2, %cst_24 {dimension_numbers = #tpu.dot_dimension_numbers<[1], [0], [0], [1], [0, 0, 1, 1], [], []>} : vector<8x128xf32>, vector<128x128xf32>, vector<8x128xf32> -> vector<8x128xf32>
    %52 = arith.addf %4, %51 : vector<8x128xf32>
    %cst_25 = arith.constant 0.000000e+00 : f32
    %53 = vector.broadcast %cst_25 : f32 to vector<8x128xf32>
    %54 = arith.maximumf %52, %53 : vector<8x128xf32>
    %55 = arith.addf %6, %51 : vector<8x128xf32>
    %cst_26 = arith.constant 0.000000e+00 : f32
    %56 = vector.broadcast %cst_26 : f32 to vector<8x128xf32>
    %57 = arith.minimumf %55, %56 : vector<8x128xf32>
    %58 = arith.addf %54, %57 : vector<8x128xf32>
    %59 = arith.index_cast %c4_i32 : i32 to index
    %c0_27 = arith.constant 0 : index
    %c0_28 = arith.constant 0 : index
    %60 = vector.load %arg4[%59, %c0_27, %c0_28] : memref<5x8x128xf32, #tpu.memory_space<vmem>>, vector<1x8x128xf32>
    %61 = vector.shape_cast %60 : vector<1x8x128xf32> to vector<8x128xf32>
    %62 = vector.shape_cast %58 : vector<8x128xf32> to vector<1x8x128xf32>
    tpu.vector_store %arg4[%59, %c0_27, %c0_28], %62 {strides = array<i32>} : memref<5x8x128xf32, #tpu.memory_space<vmem>>, vector<1x8x128xf32>,
    %c4_i32_29 = arith.constant 4 : i32
    return
  }
  func.func @transform_0(%arg0: i32) -> (i32, i32) {
    %c0_i32 = arith.constant 0 : i32
    %c0_i32_0 = arith.constant 0 : i32
    return %arg0, %c0_i32 : i32, i32
  }
  func.func @transform_1(%arg0: i32) -> (i32, i32) {
    %c0_i32 = arith.constant 0 : i32
    %c0_i32_0 = arith.constant 0 : i32
    %c0_i32_1 = arith.constant 0 : i32
    return %c0_i32, %c0_i32_0 : i32, i32
  }
  func.func @transform_2(%arg0: i32) -> (i32, i32) {
    %c0_i32 = arith.constant 0 : i32
    %c0_i32_0 = arith.constant 0 : i32
    %c0_i32_1 = arith.constant 0 : i32
    return %c0_i32, %c0_i32_0 : i32, i32
  }
  func.func @transform_3(%arg0: i32) -> (i32, i32, i32) {
    %c0_i32 = arith.constant 0 : i32
    %c0_i32_0 = arith.constant 0 : i32
    %c0_i32_1 = arith.constant 0 : i32
    return %c0_i32, %arg0, %c0_i32_0 : i32, i32, i32
  }
}

module attributes {stable_mosaic.version = 11 : i64} {
  func.func @_lista_kernel(%arg0: i32, %arg1: memref<8x128xf32, #tpu.memory_space<vmem>>, %arg2: memref<128x128xf32, #tpu.memory_space<vmem>>, %arg3: memref<1x1xf32, #tpu.memory_space<smem>>, %arg4: memref<5x8x128xf32, #tpu.memory_space<vmem>>) attributes {dimension_semantics = [#tpu.dimension_semantics<parallel>], iteration_bounds = array<i64: 1>, scalar_prefetch = 0 : i64, scratch_operands = 0 : i64, tpu.core_type = #tpu.core_type<tc>, window_params = [{transform_indices = @transform_0, window_bounds = array<i64: 8, 128>}, {pipeline_mode = #tpu.pipeline_mode<synchronous>, transform_indices = @transform_1, window_bounds = array<i64: 128, 128>}, {transform_indices = @transform_2, window_bounds = array<i64: 1, 1>}, {transform_indices = @transform_3, window_bounds = array<i64: 5, 8, 128>}]} {
    %c0 = arith.constant 0 : index
    %c0_0 = arith.constant 0 : index
    %0 = memref.load %arg3[%c0, %c0_0] : memref<1x1xf32, #tpu.memory_space<smem>>
    %c0_1 = arith.constant 0 : index
    %c0_2 = arith.constant 0 : index
    %1 = vector.load %arg1[%c0_1, %c0_2] : memref<8x128xf32, #tpu.memory_space<vmem>>, vector<8x128xf32>
    %c0_3 = arith.constant 0 : index
    %c0_4 = arith.constant 0 : index
    %2 = vector.load %arg2[%c0_3, %c0_4] : memref<128x128xf32, #tpu.memory_space<vmem>>, vector<128x128xf32>
    %3 = vector.broadcast %0 : f32 to vector<8x128xf32>
    %4 = arith.subf %1, %3 : vector<8x128xf32>
    %5 = vector.broadcast %0 : f32 to vector<8x128xf32>
    %6 = arith.addf %1, %5 : vector<8x128xf32>
    %cst = arith.constant 0.000000e+00 : f32
    %7 = vector.broadcast %cst : f32 to vector<8x128xf32>
    %8 = arith.maximumf %4, %7 : vector<8x128xf32>
    %cst_5 = arith.constant 0.000000e+00 : f32
    %9 = vector.broadcast %cst_5 : f32 to vector<8x128xf32>
    %10 = arith.minimumf %6, %9 : vector<8x128xf32>
    %11 = arith.addf %8, %10 : vector<8x128xf32>
    %c0_6 = arith.constant 0 : index
    %c0_7 = arith.constant 0 : index
    %c0_8 = arith.constant 0 : index
    %12 = vector.load %arg4[%c0_6, %c0_7, %c0_8] : memref<5x8x128xf32, #tpu.memory_space<vmem>>, vector<1x8x128xf32>
    %13 = vector.shape_cast %12 : vector<1x8x128xf32> to vector<8x128xf32>
    %14 = vector.shape_cast %11 : vector<8x128xf32> to vector<1x8x128xf32>
    tpu.vector_store %arg4[%c0_6, %c0_7, %c0_8], %14 {strides = array<i32>} : memref<5x8x128xf32, #tpu.memory_space<vmem>>, vector<1x8x128xf32>,
    %c1_i32 = arith.constant 1 : i32
    %cst_9 = arith.constant dense<0.000000e+00> : vector<8x128xf32>
    %15 = tpu.matmul %11, %2, %cst_9 {dimension_numbers = #tpu.dot_dimension_numbers<[1], [0], [0], [1], [0, 0, 1, 1], [], []>} : vector<8x128xf32>, vector<128x128xf32>, vector<8x128xf32> -> vector<8x128xf32>
    %16 = arith.addf %4, %15 : vector<8x128xf32>
    %cst_10 = arith.constant 0.000000e+00 : f32
    %17 = vector.broadcast %cst_10 : f32 to vector<8x128xf32>
    %18 = arith.maximumf %16, %17 : vector<8x128xf32>
    %19 = arith.addf %6, %15 : vector<8x128xf32>
    %cst_11 = arith.constant 0.000000e+00 : f32
    %20 = vector.broadcast %cst_11 : f32 to vector<8x128xf32>
    %21 = arith.minimumf %19, %20 : vector<8x128xf32>
    %22 = arith.addf %18, %21 : vector<8x128xf32>
    %23 = arith.index_cast %c1_i32 : i32 to index
    %c0_12 = arith.constant 0 : index
    %c0_13 = arith.constant 0 : index
    %24 = vector.load %arg4[%23, %c0_12, %c0_13] : memref<5x8x128xf32, #tpu.memory_space<vmem>>, vector<1x8x128xf32>
    %25 = vector.shape_cast %24 : vector<1x8x128xf32> to vector<8x128xf32>
    %26 = vector.shape_cast %22 : vector<8x128xf32> to vector<1x8x128xf32>
    tpu.vector_store %arg4[%23, %c0_12, %c0_13], %26 {strides = array<i32>} : memref<5x8x128xf32, #tpu.memory_space<vmem>>, vector<1x8x128xf32>,
    %c2_i32 = arith.constant 2 : i32
    %cst_14 = arith.constant dense<0.000000e+00> : vector<8x128xf32>
    %27 = tpu.matmul %22, %2, %cst_14 {dimension_numbers = #tpu.dot_dimension_numbers<[1], [0], [0], [1], [0, 0, 1, 1], [], []>} : vector<8x128xf32>, vector<128x128xf32>, vector<8x128xf32> -> vector<8x128xf32>
    %28 = arith.addf %4, %27 : vector<8x128xf32>
    %cst_15 = arith.constant 0.000000e+00 : f32
    %29 = vector.broadcast %cst_15 : f32 to vector<8x128xf32>
    %30 = arith.maximumf %28, %29 : vector<8x128xf32>
    %31 = arith.addf %6, %27 : vector<8x128xf32>
    %cst_16 = arith.constant 0.000000e+00 : f32
    %32 = vector.broadcast %cst_16 : f32 to vector<8x128xf32>
    %33 = arith.minimumf %31, %32 : vector<8x128xf32>
    %34 = arith.addf %30, %33 : vector<8x128xf32>
    %35 = arith.index_cast %c2_i32 : i32 to index
    %c0_17 = arith.constant 0 : index
    %c0_18 = arith.constant 0 : index
    %36 = vector.load %arg4[%35, %c0_17, %c0_18] : memref<5x8x128xf32, #tpu.memory_space<vmem>>, vector<1x8x128xf32>
    %37 = vector.shape_cast %36 : vector<1x8x128xf32> to vector<8x128xf32>
    %38 = vector.shape_cast %34 : vector<8x128xf32> to vector<1x8x128xf32>
    tpu.vector_store %arg4[%35, %c0_17, %c0_18], %38 {strides = array<i32>} : memref<5x8x128xf32, #tpu.memory_space<vmem>>, vector<1x8x128xf32>,
    %c3_i32 = arith.constant 3 : i32
    %cst_19 = arith.constant dense<0.000000e+00> : vector<8x128xf32>
    %39 = tpu.matmul %34, %2, %cst_19 {dimension_numbers = #tpu.dot_dimension_numbers<[1], [0], [0], [1], [0, 0, 1, 1], [], []>} : vector<8x128xf32>, vector<128x128xf32>, vector<8x128xf32> -> vector<8x128xf32>
    %40 = arith.addf %4, %39 : vector<8x128xf32>
    %cst_20 = arith.constant 0.000000e+00 : f32
    %41 = vector.broadcast %cst_20 : f32 to vector<8x128xf32>
    %42 = arith.maximumf %40, %41 : vector<8x128xf32>
    %43 = arith.addf %6, %39 : vector<8x128xf32>
    %cst_21 = arith.constant 0.000000e+00 : f32
    %44 = vector.broadcast %cst_21 : f32 to vector<8x128xf32>
    %45 = arith.minimumf %43, %44 : vector<8x128xf32>
    %46 = arith.addf %42, %45 : vector<8x128xf32>
    %47 = arith.index_cast %c3_i32 : i32 to index
    %c0_22 = arith.constant 0 : index
    %c0_23 = arith.constant 0 : index
    %48 = vector.load %arg4[%47, %c0_22, %c0_23] : memref<5x8x128xf32, #tpu.memory_space<vmem>>, vector<1x8x128xf32>
    %49 = vector.shape_cast %48 : vector<1x8x128xf32> to vector<8x128xf32>
    %50 = vector.shape_cast %46 : vector<8x128xf32> to vector<1x8x128xf32>
    tpu.vector_store %arg4[%47, %c0_22, %c0_23], %50 {strides = array<i32>} : memref<5x8x128xf32, #tpu.memory_space<vmem>>, vector<1x8x128xf32>,
    %c4_i32 = arith.constant 4 : i32
    %cst_24 = arith.constant dense<0.000000e+00> : vector<8x128xf32>
    %51 = tpu.matmul %46, %2, %cst_24 {dimension_numbers = #tpu.dot_dimension_numbers<[1], [0], [0], [1], [0, 0, 1, 1], [], []>} : vector<8x128xf32>, vector<128x128xf32>, vector<8x128xf32> -> vector<8x128xf32>
    %52 = arith.addf %4, %51 : vector<8x128xf32>
    %cst_25 = arith.constant 0.000000e+00 : f32
    %53 = vector.broadcast %cst_25 : f32 to vector<8x128xf32>
    %54 = arith.maximumf %52, %53 : vector<8x128xf32>
    %55 = arith.addf %6, %51 : vector<8x128xf32>
    %cst_26 = arith.constant 0.000000e+00 : f32
    %56 = vector.broadcast %cst_26 : f32 to vector<8x128xf32>
    %57 = arith.minimumf %55, %56 : vector<8x128xf32>
    %58 = arith.addf %54, %57 : vector<8x128xf32>
    %59 = arith.index_cast %c4_i32 : i32 to index
    %c0_27 = arith.constant 0 : index
    %c0_28 = arith.constant 0 : index
    %60 = vector.load %arg4[%59, %c0_27, %c0_28] : memref<5x8x128xf32, #tpu.memory_space<vmem>>, vector<1x8x128xf32>
    %61 = vector.shape_cast %60 : vector<1x8x128xf32> to vector<8x128xf32>
    %62 = vector.shape_cast %58 : vector<8x128xf32> to vector<1x8x128xf32>
    tpu.vector_store %arg4[%59, %c0_27, %c0_28], %62 {strides = array<i32>} : memref<5x8x128xf32, #tpu.memory_space<vmem>>, vector<1x8x128xf32>,
    %c4_i32_29 = arith.constant 4 : i32
    return
  }
  func.func @transform_0(%arg0: i32) -> (i32, i32) {
    %c0_i32 = arith.constant 0 : i32
    %c0_i32_0 = arith.constant 0 : i32
    return %arg0, %c0_i32 : i32, i32
  }
  func.func @transform_1(%arg0: i32) -> (i32, i32) {
    %c0_i32 = arith.constant 0 : i32
    %c0_i32_0 = arith.constant 0 : i32
    %c0_i32_1 = arith.constant 0 : i32
    return %c0_i32, %c0_i32_0 : i32, i32
  }
  func.func @transform_2(%arg0: i32) -> (i32, i32) {
    %c0_i32 = arith.constant 0 : i32
    %c0_i32_0 = arith.constant 0 : i32
    %c0_i32_1 = arith.constant 0 : i32
    return %c0_i32, %c0_i32_0 : i32, i32
  }
  func.func @transform_3(%arg0: i32) -> (i32, i32, i32) {
    %c0_i32 = arith.constant 0 : i32
    %c0_i32_0 = arith.constant 0 : i32
    %c0_i32_1 = arith.constant 0 : i32
    return %c0_i32, %arg0, %c0_i32_0 : i32, i32, i32
  }
}

</mosaic_0001>

<llo_original>
// kernel: _lista_forward_impl.1
$region0: #{_lista_forward_impl.1}
  #allocation0 [shape = 'u32[]', space=smem, size = 0x4, offset = 0x4, fixed_abs, tag = 'smem constant byte address 0x4 - core index']
  #allocation1 [shape = 'u32[144,128]{1,0:T(1,128)}', space=vmem, size = 0x12000, scoped, tag = 'internal scratch']
  #allocation2 [shape = 'f32[1,1]{1,0:T(1,128)S(6)}', space=smem, size = 0x200, scoped, tag = 'scoped memory for _lista_forward_impl.1']
  %s0 = inlined_call_operand.vmem [shape: f32[8,128], index: 0, kind: input, shape index: {}]
  %s1 = inlined_call_operand.hbm [shape: f32[128,128], index: 1, kind: input, shape index: {}]
  %s2 = inlined_call_operand.<no memory space> [shape: f32[1,1], index: 2, kind: input, shape index: {}]
  %s3 = inlined_call_operand.hbm [shape: f32[5,8,128], index: 3, kind: output, shape index: {}]
  %s4 = sld [smem:[#allocation0]]
  $region26: #{_lista_forward_impl.1} parent=0
    _
  %s6 = ssub.s32 1, %s4
  %s7 = scalar_select 0, %s6, %s4
  %8 = sst [smem:[#allocation2]] %s2
  $region1: #{_lista_forward_impl.1} parent=0
    #allocation3 [shape = 'u8[65536]{0}', space=vmem, size = 0x10000, scoped, tag = 'input window, operand 1, single buffered']
    #allocation4 [shape = 's32[1]{0}', space=sflag, size = 0x4, scoped, tag = 'scoped memory for _lista_forward_impl.1']
    #allocation5 [shape = 's32[1]{0}', space=sflag, size = 0x4, scoped, tag = 'scoped memory for _lista_forward_impl.1']
    #allocation6 [shape = 'u8[20480]{0}', space=vmem, size = 0x5000, scoped, tag = 'output window, operand 0, single buffered']
    %9 = vsyncpa [#allocation4], 0
    %10 = vsyncpa [#allocation5], 0
    // Predicated region
    $region2: #{_lista_forward_impl.1} parent=1 // pred_check
      _
    $region3: #{_lista_forward_impl.1} parent=1 // pred_check_branch
      %12 = sbr.rel (0) target = $region5
    $region4: #{_lista_forward_impl.1} parent=1 // pred_region
      _
    $region5: #{_lista_forward_impl.1} parent=1 // pred_fallthru
      _
    // Predicated region
    $region6: #{_lista_forward_impl.1} parent=1 // pred_check
      _
    $region7: #{_lista_forward_impl.1} parent=1 // pred_check_branch
      %14 = sbr.rel (0) target = $region9
    $region8: #{_lista_forward_impl.1} parent=1 // pred_region
      %s16 = ssub.s32 2048, 2048
      %17 = vsyncadd [#allocation4], %s16
      %s18 = sshll.u32 [#allocation3], 4
      %s19 = int_to_ptr.vmem [resolvable:$true] %s18
      %24 = dma.hbm_to_vmem [thread:$0]  %s1, 2048, %s19, [#allocation4], 128, 128, 8
    $region9: #{_lista_forward_impl.1} parent=1 // pred_fallthru
      _
    // Predicated region
    $region10: #{_lista_forward_impl.1} parent=1 // pred_check
      _
    $region11: #{_lista_forward_impl.1} parent=1 // pred_check_branch
      %26 = sbr.rel (0) target = $region13
    $region12: #{_lista_forward_impl.1} parent=1 // pred_region
      _
    $region13: #{_lista_forward_impl.1} parent=1 // pred_fallthru
      _
    // Predicated region
    $region14: #{_lista_forward_impl.1} parent=1 // pred_check
      _
    $region15: #{_lista_forward_impl.1} parent=1 // pred_check_branch
      %28 = sbr.rel (0) target = $region17
    $region16: #{_lista_forward_impl.1} parent=1 // pred_region
      %29 = dma.done [#allocation4], 2048
    $region17: #{_lista_forward_impl.1} parent=1 // pred_fallthru
      _
    %s30 = sld [smem:[#allocation2]]
    %v31 = vld [vmem:[%s0] sm:$0xff]
    %v32 = vld [vmem:[#allocation3] sm:$0xff]
    %v33 = vld [vmem:[#allocation3 + $0x8] sm:$0xff]
    %v34 = vld [vmem:[#allocation3 + $0x10] sm:$0xff]
    %v35 = vld [vmem:[#allocation3 + $0x18] sm:$0xff]
    %v36 = vld [vmem:[#allocation3 + $0x20] sm:$0xff]
    %v37 = vld [vmem:[#allocation3 + $0x28] sm:$0xff]
    %v38 = vld [vmem:[#allocation3 + $0x30] sm:$0xff]
    %v39 = vld [vmem:[#allocation3 + $0x38] sm:$0xff]
    %v40 = vld [vmem:[#allocation3 + $0x40] sm:$0xff]
    %v41 = vld [vmem:[#allocation3 + $0x48] sm:$0xff]
    %v42 = vld [vmem:[#allocation3 + $0x50] sm:$0xff]
    %v43 = vld [vmem:[#allocation3 + $0x58] sm:$0xff]
    %v44 = vld [vmem:[#allocation3 + $0x60] sm:$0xff]
    %v45 = vld [vmem:[#allocation3 + $0x68] sm:$0xff]
    %v46 = vld [vmem:[#allocation3 + $0x70] sm:$0xff]
    %v47 = vld [vmem:[#allocation3 + $0x78] sm:$0xff]
    %v48 = vstv %s30
    %v49 = vsub.f32 %v31, %v48
    %v50 = vadd.f32 %v31, %v48
    %v51 = vmax.f32 %v49, 0.0
    %v52 = vmin.f32 %v50, 0.0
    %v53 = vadd.f32 %v51, %v52
    %54 = vst [vmem:[#allocation6] sm:$0xff] %v53
    %55 = vmatprep.subr.mxu0 0.0
    %56 = vmatpush1.msra.mxu0 %v32
    %57 = vmatprep.subr.mxu0 0.0
    %58 = vmatpush1.msra.mxu0 %v33
    %59 = vmatprep.subr.mxu0 0.0
    %60 = vmatpush1.msra.mxu0 %v34
    %61 = vmatprep.subr.mxu0 0.0
    %62 = vmatpush1.msra.mxu0 %v35
    %63 = vmatprep.subr.mxu0 0.0
    %64 = vmatpush1.msra.mxu0 %v36
    %65 = vmatprep.subr.mxu0 0.0
    %66 = vmatpush1.msra.mxu0 %v37
    %67 = vmatprep.subr.mxu0 0.0
    %68 = vmatpush1.msra.mxu0 %v38
    %69 = vmatprep.subr.mxu0 0.0
    %70 = vmatpush1.msra.mxu0 %v39
    %71 = vmatprep.subr.mxu0 0.0
    %72 = vmatpush1.msra.mxu0 %v40
    %73 = vmatprep.subr.mxu0 0.0
    %74 = vmatpush1.msra.mxu0 %v41
    %75 = vmatprep.subr.mxu0 0.0
    %76 = vmatpush1.msra.mxu0 %v42
    %77 = vmatprep.subr.mxu0 0.0
    %78 = vmatpush1.msra.mxu0 %v43
    %79 = vmatprep.subr.mxu0 0.0
    %80 = vmatpush1.msra.mxu0 %v44
    %81 = vmatprep.subr.mxu0 0.0
    %82 = vmatpush1.msra.mxu0 %v45
    %83 = vmatprep.subr.mxu0 0.0
    %84 = vmatpush1.msra.mxu0 %v46
    %85 = vmatprep.subr.mxu0 0.0
    %86 = vmatpush1.msra.mxu0 %v47
    %87 = vmatprep.subr.mxu0 0.0
    %88 = vmatpush1.msra.mxu0 0.0
    %89 = vmatprep.subr.mxu0 0.0
    %90 = vmatpush1.msra.mxu0 0.0
    %91 = vmatprep.subr.mxu0 0.0
    %92 = vmatpush1.msra.mxu0 0.0
    %93 = vmatprep.subr.mxu0 0.0
    %94 = vmatpush1.msra.mxu0 0.0
    %95 = vmatprep.subr.mxu0 0.0
    %96 = vmatpush1.msra.mxu0 0.0
    %97 = vmatprep.subr.mxu0 0.0
    %98 = vmatpush1.msra.mxu0 0.0
    %99 = vmatprep.subr.mxu0 0.0
    %100 = vmatpush1.msra.mxu0 0.0
    %101 = vmatprep.subr.mxu0 0.0
    %102 = vmatpush1.msra.mxu0 0.0
    %103 = vmatprep.subr.mxu0 0.0
    %104 = vmatpush1.msra.mxu0 0.0
    %105 = vmatprep.subr.mxu0 0.0
    %106 = vmatpush1.msra.mxu0 0.0
    %107 = vmatprep.subr.mxu0 0.0
    %108 = vmatpush1.msra.mxu0 0.0
    %109 = vmatprep.subr.mxu0 0.0
    %110 = vmatpush1.msra.mxu0 0.0
    %111 = vmatprep.subr.mxu0 0.0
    %112 = vmatpush1.msra.mxu0 0.0
    %113 = vmatprep.subr.mxu0 0.0
    %114 = vmatpush1.msra.mxu0 0.0
    %115 = vmatprep.subr.mxu0 0.0
    %116 = vmatpush1.msra.mxu0 0.0
    %117 = vmatprep.subr.mxu0 0.0
    %118 = vmatpush1.msra.mxu0 0.0
    %119 = vmatprep.mubr.f32.mxu0 0.0
    %120 = vmatmul.mubr.f32.gmra.mrb[0].mxu0 %v53
    %v121 = vpop.f32.mrb[0].mxu0
    %v122 = vadd.f32 0.0, %v121
    %v123 = vpop.f32.mrb[0].mxu0
    %124 = vdwg.mxu0
    %v125 = vadd.f32 %v49, %v122
    %v126 = vmax.f32 %v125, 0.0
    %v127 = vadd.f32 %v50, %v122
    %v128 = vmin.f32 %v127, 0.0
    %v129 = vadd.f32 %v126, %v128
    %s130 = scalar_lea.vmem [#allocation6], 8
    %131 = vst [vmem:[%s130] sm:$0xff] %v129
    %132 = vmatprep.subr.mxu0 0.0
    %133 = vmatpush1.msra.mxu0 %v32
    %134 = vmatprep.subr.mxu0 0.0
    %135 = vmatpush1.msra.mxu0 %v33
    %136 = vmatprep.subr.mxu0 0.0
    %137 = vmatpush1.msra.mxu0 %v34
    %138 = vmatprep.subr.mxu0 0.0
    %139 = vmatpush1.msra.mxu0 %v35
    %140 = vmatprep.subr.mxu0 0.0
    %141 = vmatpush1.msra.mxu0 %v36
    %142 = vmatprep.subr.mxu0 0.0
    %143 = vmatpush1.msra.mxu0 %v37
    %144 = vmatprep.subr.mxu0 0.0
    %145 = vmatpush1.msra.mxu0 %v38
    %146 = vmatprep.subr.mxu0 0.0
    %147 = vmatpush1.msra.mxu0 %v39
    %148 = vmatprep.subr.mxu0 0.0
    %149 = vmatpush1.msra.mxu0 %v40
    %150 = vmatprep.subr.mxu0 0.0
    %151 = vmatpush1.msra.mxu0 %v41
    %152 = vmatprep.subr.mxu0 0.0
    %153 = vmatpush1.msra.mxu0 %v42
    %154 = vmatprep.subr.mxu0 0.0
    %155 = vmatpush1.msra.mxu0 %v43
    %156 = vmatprep.subr.mxu0 0.0
    %157 = vmatpush1.msra.mxu0 %v44
    %158 = vmatprep.subr.mxu0 0.0
    %159 = vmatpush1.msra.mxu0 %v45
    %160 = vmatprep.subr.mxu0 0.0
    %161 = vmatpush1.msra.mxu0 %v46
    %162 = vmatprep.subr.mxu0 0.0
    %163 = vmatpush1.msra.mxu0 %v47
    %164 = vmatprep.subr.mxu0 0.0
    %165 = vmatpush1.msra.mxu0 0.0
    %166 = vmatprep.subr.mxu0 0.0
    %167 = vmatpush1.msra.mxu0 0.0
    %168 = vmatprep.subr.mxu0 0.0
    %169 = vmatpush1.msra.mxu0 0.0
    %170 = vmatprep.subr.mxu0 0.0
    %171 = vmatpush1.msra.mxu0 0.0
    %172 = vmatprep.subr.mxu0 0.0
    %173 = vmatpush1.msra.mxu0 0.0
    %174 = vmatprep.subr.mxu0 0.0
    %175 = vmatpush1.msra.mxu0 0.0
    %176 = vmatprep.subr.mxu0 0.0
    %177 = vmatpush1.msra.mxu0 0.0
    %178 = vmatprep.subr.mxu0 0.0
    %179 = vmatpush1.msra.mxu0 0.0
    %180 = vmatprep.subr.mxu0 0.0
    %181 = vmatpush1.msra.mxu0 0.0
    %182 = vmatprep.subr.mxu0 0.0
    %183 = vmatpush1.msra.mxu0 0.0
    %184 = vmatprep.subr.mxu0 0.0
    %185 = vmatpush1.msra.mxu0 0.0
    %186 = vmatprep.subr.mxu0 0.0
    %187 = vmatpush1.msra.mxu0 0.0
    %188 = vmatprep.subr.mxu0 0.0
    %189 = vmatpush1.msra.mxu0 0.0
    %190 = vmatprep.subr.mxu0 0.0
    %191 = vmatpush1.msra.mxu0 0.0
    %192 = vmatprep.subr.mxu0 0.0
    %193 = vmatpush1.msra.mxu0 0.0
    %194 = vmatprep.subr.mxu0 0.0
    %195 = vmatpush1.msra.mxu0 0.0
    %196 = vmatprep.mubr.f32.mxu0 0.0
    %197 = vmatmul.mubr.f32.gmra.mrb[0].mxu0 %v129
    %v198 = vpop.f32.mrb[0].mxu0
    %v199 = vadd.f32 0.0, %v198
    %v200 = vpop.f32.mrb[0].mxu0
    %201 = vdwg.mxu0
    %v202 = vadd.f32 %v49, %v199
    %v203 = vmax.f32 %v202, 0.0
    %v204 = vadd.f32 %v50, %v199
    %v205 = vmin.f32 %v204, 0.0
    %v206 = vadd.f32 %v203, %v205
    %s207 = scalar_lea.vmem [#allocation6], 16
    %208 = vst [vmem:[%s207] sm:$0xff] %v206
    %209 = vmatprep.subr.mxu0 0.0
    %210 = vmatpush1.msra.mxu0 %v32
    %211 = vmatprep.subr.mxu0 0.0
    %212 = vmatpush1.msra.mxu0 %v33
    %213 = vmatprep.subr.mxu0 0.0
    %214 = vmatpush1.msra.mxu0 %v34
    %215 = vmatprep.subr.mxu0 0.0
    %216 = vmatpush1.msra.mxu0 %v35
    %217 = vmatprep.subr.mxu0 0.0
    %218 = vmatpush1.msra.mxu0 %v36
    %219 = vmatprep.subr.mxu0 0.0
    %220 = vmatpush1.msra.mxu0 %v37
    %221 = vmatprep.subr.mxu0 0.0
    %222 = vmatpush1.msra.mxu0 %v38
    %223 = vmatprep.subr.mxu0 0.0
    %224 = vmatpush1.msra.mxu0 %v39
    %225 = vmatprep.subr.mxu0 0.0
    %226 = vmatpush1.msra.mxu0 %v40
    %227 = vmatprep.subr.mxu0 0.0
    %228 = vmatpush1.msra.mxu0 %v41
    %229 = vmatprep.subr.mxu0 0.0
    %230 = vmatpush1.msra.mxu0 %v42
    %231 = vmatprep.subr.mxu0 0.0
    %232 = vmatpush1.msra.mxu0 %v43
    %233 = vmatprep.subr.mxu0 0.0
    %234 = vmatpush1.msra.mxu0 %v44
    %235 = vmatprep.subr.mxu0 0.0
    %236 = vmatpush1.msra.mxu0 %v45
    %237 = vmatprep.subr.mxu0 0.0
    %238 = vmatpush1.msra.mxu0 %v46
    %239 = vmatprep.subr.mxu0 0.0
    %240 = vmatpush1.msra.mxu0 %v47
    %241 = vmatprep.subr.mxu0 0.0
    %242 = vmatpush1.msra.mxu0 0.0
    %243 = vmatprep.subr.mxu0 0.0
    %244 = vmatpush1.msra.mxu0 0.0
    %245 = vmatprep.subr.mxu0 0.0
    %246 = vmatpush1.msra.mxu0 0.0
    %247 = vmatprep.subr.mxu0 0.0
    %248 = vmatpush1.msra.mxu0 0.0
    %249 = vmatprep.subr.mxu0 0.0
    %250 = vmatpush1.msra.mxu0 0.0
    %251 = vmatprep.subr.mxu0 0.0
    %252 = vmatpush1.msra.mxu0 0.0
    %253 = vmatprep.subr.mxu0 0.0
    %254 = vmatpush1.msra.mxu0 0.0
    %255 = vmatprep.subr.mxu0 0.0
    %256 = vmatpush1.msra.mxu0 0.0
    %257 = vmatprep.subr.mxu0 0.0
    %258 = vmatpush1.msra.mxu0 0.0
    %259 = vmatprep.subr.mxu0 0.0
    %260 = vmatpush1.msra.mxu0 0.0
    %261 = vmatprep.subr.mxu0 0.0
    %262 = vmatpush1.msra.mxu0 0.0
    %263 = vmatprep.subr.mxu0 0.0
    %264 = vmatpush1.msra.mxu0 0.0
    %265 = vmatprep.subr.mxu0 0.0
    %266 = vmatpush1.msra.mxu0 0.0
    %267 = vmatprep.subr.mxu0 0.0
    %268 = vmatpush1.msra.mxu0 0.0
    %269 = vmatprep.subr.mxu0 0.0
    %270 = vmatpush1.msra.mxu0 0.0
    %271 = vmatprep.subr.mxu0 0.0
    %272 = vmatpush1.msra.mxu0 0.0
    %273 = vmatprep.mubr.f32.mxu0 0.0
    %274 = vmatmul.mubr.f32.gmra.mrb[0].mxu0 %v206
    %v275 = vpop.f32.mrb[0].mxu0
    %v276 = vadd.f32 0.0, %v275
    %v277 = vpop.f32.mrb[0].mxu0
    %278 = vdwg.mxu0
    %v279 = vadd.f32 %v49, %v276
    %v280 = vmax.f32 %v279, 0.0
    %v281 = vadd.f32 %v50, %v276
    %v282 = vmin.f32 %v281, 0.0
    %v283 = vadd.f32 %v280, %v282
    %s284 = scalar_lea.vmem [#allocation6], 24
    %285 = vst [vmem:[%s284] sm:$0xff] %v283
    %286 = vmatprep.subr.mxu0 0.0
    %287 = vmatpush1.msra.mxu0 %v32
    %288 = vmatprep.subr.mxu0 0.0
    %289 = vmatpush1.msra.mxu0 %v33
    %290 = vmatprep.subr.mxu0 0.0
    %291 = vmatpush1.msra.mxu0 %v34
    %292 = vmatprep.subr.mxu0 0.0
    %293 = vmatpush1.msra.mxu0 %v35
    %294 = vmatprep.subr.mxu0 0.0
    %295 = vmatpush1.msra.mxu0 %v36
    %296 = vmatprep.subr.mxu0 0.0
    %297 = vmatpush1.msra.mxu0 %v37
    %298 = vmatprep.subr.mxu0 0.0
    %299 = vmatpush1.msra.mxu0 %v38
    %300 = vmatprep.subr.mxu0 0.0
    %301 = vmatpush1.msra.mxu0 %v39
    %302 = vmatprep.subr.mxu0 0.0
    %303 = vmatpush1.msra.mxu0 %v40
    %304 = vmatprep.subr.mxu0 0.0
    %305 = vmatpush1.msra.mxu0 %v41
    %306 = vmatprep.subr.mxu0 0.0
    %307 = vmatpush1.msra.mxu0 %v42
    %308 = vmatprep.subr.mxu0 0.0
    %309 = vmatpush1.msra.mxu0 %v43
    %310 = vmatprep.subr.mxu0 0.0
    %311 = vmatpush1.msra.mxu0 %v44
    %312 = vmatprep.subr.mxu0 0.0
    %313 = vmatpush1.msra.mxu0 %v45
    %314 = vmatprep.subr.mxu0 0.0
    %315 = vmatpush1.msra.mxu0 %v46
    %316 = vmatprep.subr.mxu0 0.0
    %317 = vmatpush1.msra.mxu0 %v47
    %318 = vmatprep.subr.mxu0 0.0
    %319 = vmatpush1.msra.mxu0 0.0
    %320 = vmatprep.subr.mxu0 0.0
    %321 = vmatpush1.msra.mxu0 0.0
    %322 = vmatprep.subr.mxu0 0.0
    %323 = vmatpush1.msra.mxu0 0.0
    %324 = vmatprep.subr.mxu0 0.0
    %325 = vmatpush1.msra.mxu0 0.0
    %326 = vmatprep.subr.mxu0 0.0
    %327 = vmatpush1.msra.mxu0 0.0
    %328 = vmatprep.subr.mxu0 0.0
    %329 = vmatpush1.msra.mxu0 0.0
    %330 = vmatprep.subr.mxu0 0.0
    %331 = vmatpush1.msra.mxu0 0.0
    %332 = vmatprep.subr.mxu0 0.0
    %333 = vmatpush1.msra.mxu0 0.0
    %334 = vmatprep.subr.mxu0 0.0
    %335 = vmatpush1.msra.mxu0 0.0
    %336 = vmatprep.subr.mxu0 0.0
    %337 = vmatpush1.msra.mxu0 0.0
    %338 = vmatprep.subr.mxu0 0.0
    %339 = vmatpush1.msra.mxu0 0.0
    %340 = vmatprep.subr.mxu0 0.0
    %341 = vmatpush1.msra.mxu0 0.0
    %342 = vmatprep.subr.mxu0 0.0
    %343 = vmatpush1.msra.mxu0 0.0
    %344 = vmatprep.subr.mxu0 0.0
    %345 = vmatpush1.msra.mxu0 0.0
    %346 = vmatprep.subr.mxu0 0.0
    %347 = vmatpush1.msra.mxu0 0.0
    %348 = vmatprep.subr.mxu0 0.0
    %349 = vmatpush1.msra.mxu0 0.0
    %350 = vmatprep.mubr.f32.mxu0 0.0
    %351 = vmatmul.mubr.f32.gmra.mrb[0].mxu0 %v283
    %v352 = vpop.f32.mrb[0].mxu0
    %v353 = vadd.f32 0.0, %v352
    %v354 = vpop.f32.mrb[0].mxu0
    %355 = vdwg.mxu0
    %v356 = vadd.f32 %v49, %v353
    %v357 = vmax.f32 %v356, 0.0
    %v358 = vadd.f32 %v50, %v353
    %v359 = vmin.f32 %v358, 0.0
    %v360 = vadd.f32 %v357, %v359
    %s361 = scalar_lea.vmem [#allocation6], 32
    %362 = vst [vmem:[%s361] sm:$0xff] %v360
    // Predicated region
    $region18: #{_lista_forward_impl.1} parent=1 // pred_check
      _
    $region19: #{_lista_forward_impl.1} parent=1 // pred_check_branch
      %364 = sbr.rel (0) target = $region21
    $region20: #{_lista_forward_impl.1} parent=1 // pred_region
      %s366 = ssub.s32 640, 640
      %367 = vsyncadd [#allocation5], %s366
      %s368 = sshll.u32 [#allocation6], 4
      %s369 = int_to_ptr.vmem [resolvable:$true] %s368
      %374 = dma.vmem_to_hbm [thread:$0]  %s369, 640, %s3, [#allocation5], 128, 128, 8
    $region21: #{_lista_forward_impl.1} parent=1 // pred_fallthru
      _
    // Predicated region
    $region22: #{_lista_forward_impl.1} parent=1 // pred_check
      _
    $region23: #{_lista_forward_impl.1} parent=1 // pred_check_branch
      %376 = sbr.rel (0) target = $region25
    $region24: #{_lista_forward_impl.1} parent=1 // pred_region
      %377 = dma.done [#allocation5], 640
    $region25: #{_lista_forward_impl.1} parent=1 // pred_fallthru
      _
    %378 = vsyncpa [#allocation4], 1
    %379 = vsyncpa [#allocation5], 1

// kernel: _lista_forward_impl.1
$region0: #{_lista_forward_impl.1}
  #allocation0 [shape = 'u32[]', space=smem, size = 0x4, offset = 0x4, fixed_abs, tag = 'smem constant byte address 0x4 - core index']
  #allocation1 [shape = 'u32[144,128]{1,0:T(1,128)}', space=vmem, size = 0x12000, scoped, tag = 'internal scratch']
  #allocation2 [shape = 'f32[1,1]{1,0:T(1,128)S(6)}', space=smem, size = 0x200, scoped, tag = 'scoped memory for _lista_forward_impl.1']
  %s0 = inlined_call_operand.vmem [shape: f32[8,128], index: 0, kind: input, shape index: {}]
  %s1 = inlined_call_operand.hbm [shape: f32[128,128], index: 1, kind: input, shape index: {}]
  %s2 = inlined_call_operand.<no memory space> [shape: f32[1,1], index: 2, kind: input, shape index: {}]
  %s3 = inlined_call_operand.hbm [shape: f32[5,8,128], index: 3, kind: output, shape index: {}]
  %s4 = sld [smem:[#allocation0]]
  $region26: #{_lista_forward_impl.1} parent=0
    _
  %s6 = ssub.s32 1, %s4
  %s7 = scalar_select 0, %s6, %s4
  %8 = sst [smem:[#allocation2]] %s2
  $region1: #{_lista_forward_impl.1} parent=0
    #allocation3 [shape = 'u8[65536]{0}', space=vmem, size = 0x10000, scoped, tag = 'input window, operand 1, single buffered']
    #allocation4 [shape = 's32[1]{0}', space=sflag, size = 0x4, scoped, tag = 'scoped memory for _lista_forward_impl.1']
    #allocation5 [shape = 's32[1]{0}', space=sflag, size = 0x4, scoped, tag = 'scoped memory for _lista_forward_impl.1']
    #allocation6 [shape = 'u8[20480]{0}', space=vmem, size = 0x5000, scoped, tag = 'output window, operand 0, single buffered']
    %9 = vsyncpa [#allocation4], 0
    %10 = vsyncpa [#allocation5], 0
    // Predicated region
    $region2: #{_lista_forward_impl.1} parent=1 // pred_check
      _
    $region3: #{_lista_forward_impl.1} parent=1 // pred_check_branch
      %12 = sbr.rel (0) target = $region5
    $region4: #{_lista_forward_impl.1} parent=1 // pred_region
      _
    $region5: #{_lista_forward_impl.1} parent=1 // pred_fallthru
      _
    // Predicated region
    $region6: #{_lista_forward_impl.1} parent=1 // pred_check
      _
    $region7: #{_lista_forward_impl.1} parent=1 // pred_check_branch
      %14 = sbr.rel (0) target = $region9
    $region8: #{_lista_forward_impl.1} parent=1 // pred_region
      %s16 = ssub.s32 2048, 2048
      %17 = vsyncadd [#allocation4], %s16
      %s18 = sshll.u32 [#allocation3], 4
      %s19 = int_to_ptr.vmem [resolvable:$true] %s18
      %24 = dma.hbm_to_vmem [thread:$0]  %s1, 2048, %s19, [#allocation4], 128, 128, 8
    $region9: #{_lista_forward_impl.1} parent=1 // pred_fallthru
      _
    // Predicated region
    $region10: #{_lista_forward_impl.1} parent=1 // pred_check
      _
    $region11: #{_lista_forward_impl.1} parent=1 // pred_check_branch
      %26 = sbr.rel (0) target = $region13
    $region12: #{_lista_forward_impl.1} parent=1 // pred_region
      _
    $region13: #{_lista_forward_impl.1} parent=1 // pred_fallthru
      _
    // Predicated region
    $region14: #{_lista_forward_impl.1} parent=1 // pred_check
      _
    $region15: #{_lista_forward_impl.1} parent=1 // pred_check_branch
      %28 = sbr.rel (0) target = $region17
    $region16: #{_lista_forward_impl.1} parent=1 // pred_region
      %29 = dma.done [#allocation4], 2048
    $region17: #{_lista_forward_impl.1} parent=1 // pred_fallthru
      _
    %s30 = sld [smem:[#allocation2]]
    %v31 = vld [vmem:[%s0] sm:$0xff]
    %v32 = vld [vmem:[#allocation3] sm:$0xff]
    %v33 = vld [vmem:[#allocation3 + $0x8] sm:$0xff]
    %v34 = vld [vmem:[#allocation3 + $0x10] sm:$0xff]
    %v35 = vld [vmem:[#allocation3 + $0x18] sm:$0xff]
    %v36 = vld [vmem:[#allocation3 + $0x20] sm:$0xff]
    %v37 = vld [vmem:[#allocation3 + $0x28] sm:$0xff]
    %v38 = vld [vmem:[#allocation3 + $0x30] sm:$0xff]
    %v39 = vld [vmem:[#allocation3 + $0x38] sm:$0xff]
    %v40 = vld [vmem:[#allocation3 + $0x40] sm:$0xff]
    %v41 = vld [vmem:[#allocation3 + $0x48] sm:$0xff]
    %v42 = vld [vmem:[#allocation3 + $0x50] sm:$0xff]
    %v43 = vld [vmem:[#allocation3 + $0x58] sm:$0xff]
    %v44 = vld [vmem:[#allocation3 + $0x60] sm:$0xff]
    %v45 = vld [vmem:[#allocation3 + $0x68] sm:$0xff]
    %v46 = vld [vmem:[#allocation3 + $0x70] sm:$0xff]
    %v47 = vld [vmem:[#allocation3 + $0x78] sm:$0xff]
    %v48 = vstv %s30
    %v49 = vsub.f32 %v31, %v48
    %v50 = vadd.f32 %v31, %v48
    %v51 = vmax.f32 %v49, 0.0
    %v52 = vmin.f32 %v50, 0.0
    %v53 = vadd.f32 %v51, %v52
    %54 = vst [vmem:[#allocation6] sm:$0xff] %v53
    %55 = vmatprep.subr.mxu0 0.0
    %56 = vmatpush1.msra.mxu0 %v32
    %57 = vmatprep.subr.mxu0 0.0
    %58 = vmatpush1.msra.mxu0 %v33
    %59 = vmatprep.subr.mxu0 0.0
    %60 = vmatpush1.msra.mxu0 %v34
    %61 = vmatprep.subr.mxu0 0.0
    %62 = vmatpush1.msra.mxu0 %v35
    %63 = vmatprep.subr.mxu0 0.0
    %64 = vmatpush1.msra.mxu0 %v36
    %65 = vmatprep.subr.mxu0 0.0
    %66 = vmatpush1.msra.mxu0 %v37
    %67 = vmatprep.subr.mxu0 0.0
    %68 = vmatpush1.msra.mxu0 %v38
    %69 = vmatprep.subr.mxu0 0.0
    %70 = vmatpush1.msra.mxu0 %v39
    %71 = vmatprep.subr.mxu0 0.0
    %72 = vmatpush1.msra.mxu0 %v40
    %73 = vmatprep.subr.mxu0 0.0
    %74 = vmatpush1.msra.mxu0 %v41
    %75 = vmatprep.subr.mxu0 0.0
    %76 = vmatpush1.msra.mxu0 %v42
    %77 = vmatprep.subr.mxu0 0.0
    %78 = vmatpush1.msra.mxu0 %v43
    %79 = vmatprep.subr.mxu0 0.0
    %80 = vmatpush1.msra.mxu0 %v44
    %81 = vmatprep.subr.mxu0 0.0
    %82 = vmatpush1.msra.mxu0 %v45
    %83 = vmatprep.subr.mxu0 0.0
    %84 = vmatpush1.msra.mxu0 %v46
    %85 = vmatprep.subr.mxu0 0.0
    %86 = vmatpush1.msra.mxu0 %v47
    %87 = vmatprep.subr.mxu0 0.0
    %88 = vmatpush1.msra.mxu0 0.0
    %89 = vmatprep.subr.mxu0 0.0
    %90 = vmatpush1.msra.mxu0 0.0
    %91 = vmatprep.subr.mxu0 0.0
    %92 = vmatpush1.msra.mxu0 0.0
    %93 = vmatprep.subr.mxu0 0.0
    %94 = vmatpush1.msra.mxu0 0.0
    %95 = vmatprep.subr.mxu0 0.0
    %96 = vmatpush1.msra.mxu0 0.0
    %97 = vmatprep.subr.mxu0 0.0
    %98 = vmatpush1.msra.mxu0 0.0
    %99 = vmatprep.subr.mxu0 0.0
    %100 = vmatpush1.msra.mxu0 0.0
    %101 = vmatprep.subr.mxu0 0.0
    %102 = vmatpush1.msra.mxu0 0.0
    %103 = vmatprep.subr.mxu0 0.0
    %104 = vmatpush1.msra.mxu0 0.0
    %105 = vmatprep.subr.mxu0 0.0
    %106 = vmatpush1.msra.mxu0 0.0
    %107 = vmatprep.subr.mxu0 0.0
    %108 = vmatpush1.msra.mxu0 0.0
    %109 = vmatprep.subr.mxu0 0.0
    %110 = vmatpush1.msra.mxu0 0.0
    %111 = vmatprep.subr.mxu0 0.0
    %112 = vmatpush1.msra.mxu0 0.0
    %113 = vmatprep.subr.mxu0 0.0
    %114 = vmatpush1.msra.mxu0 0.0
    %115 = vmatprep.subr.mxu0 0.0
    %116 = vmatpush1.msra.mxu0 0.0
    %117 = vmatprep.subr.mxu0 0.0
    %118 = vmatpush1.msra.mxu0 0.0
    %119 = vmatprep.mubr.f32.mxu0 0.0
    %120 = vmatmul.mubr.f32.gmra.mrb[0].mxu0 %v53
    %v121 = vpop.f32.mrb[0].mxu0
    %v122 = vadd.f32 0.0, %v121
    %v123 = vpop.f32.mrb[0].mxu0
    %124 = vdwg.mxu0
    %v125 = vadd.f32 %v49, %v122
    %v126 = vmax.f32 %v125, 0.0
    %v127 = vadd.f32 %v50, %v122
    %v128 = vmin.f32 %v127, 0.0
    %v129 = vadd.f32 %v126, %v128
    %s130 = scalar_lea.vmem [#allocation6], 8
    %131 = vst [vmem:[%s130] sm:$0xff] %v129
    %132 = vmatprep.subr.mxu0 0.0
    %133 = vmatpush1.msra.mxu0 %v32
    %134 = vmatprep.subr.mxu0 0.0
    %135 = vmatpush1.msra.mxu0 %v33
    %136 = vmatprep.subr.mxu0 0.0
    %137 = vmatpush1.msra.mxu0 %v34
    %138 = vmatprep.subr.mxu0 0.0
    %139 = vmatpush1.msra.mxu0 %v35
    %140 = vmatprep.subr.mxu0 0.0
    %141 = vmatpush1.msra.mxu0 %v36
    %142 = vmatprep.subr.mxu0 0.0
    %143 = vmatpush1.msra.mxu0 %v37
    %144 = vmatprep.subr.mxu0 0.0
    %145 = vmatpush1.msra.mxu0 %v38
    %146 = vmatprep.subr.mxu0 0.0
    %147 = vmatpush1.msra.mxu0 %v39
    %148 = vmatprep.subr.mxu0 0.0
    %149 = vmatpush1.msra.mxu0 %v40
    %150 = vmatprep.subr.mxu0 0.0
    %151 = vmatpush1.msra.mxu0 %v41
    %152 = vmatprep.subr.mxu0 0.0
    %153 = vmatpush1.msra.mxu0 %v42
    %154 = vmatprep.subr.mxu0 0.0
    %155 = vmatpush1.msra.mxu0 %v43
    %156 = vmatprep.subr.mxu0 0.0
    %157 = vmatpush1.msra.mxu0 %v44
    %158 = vmatprep.subr.mxu0 0.0
    %159 = vmatpush1.msra.mxu0 %v45
    %160 = vmatprep.subr.mxu0 0.0
    %161 = vmatpush1.msra.mxu0 %v46
    %162 = vmatprep.subr.mxu0 0.0
    %163 = vmatpush1.msra.mxu0 %v47
    %164 = vmatprep.subr.mxu0 0.0
    %165 = vmatpush1.msra.mxu0 0.0
    %166 = vmatprep.subr.mxu0 0.0
    %167 = vmatpush1.msra.mxu0 0.0
    %168 = vmatprep.subr.mxu0 0.0
    %169 = vmatpush1.msra.mxu0 0.0
    %170 = vmatprep.subr.mxu0 0.0
    %171 = vmatpush1.msra.mxu0 0.0
    %172 = vmatprep.subr.mxu0 0.0
    %173 = vmatpush1.msra.mxu0 0.0
    %174 = vmatprep.subr.mxu0 0.0
    %175 = vmatpush1.msra.mxu0 0.0
    %176 = vmatprep.subr.mxu0 0.0
    %177 = vmatpush1.msra.mxu0 0.0
    %178 = vmatprep.subr.mxu0 0.0
    %179 = vmatpush1.msra.mxu0 0.0
    %180 = vmatprep.subr.mxu0 0.0
    %181 = vmatpush1.msra.mxu0 0.0
    %182 = vmatprep.subr.mxu0 0.0
    %183 = vmatpush1.msra.mxu0 0.0
    %184 = vmatprep.subr.mxu0 0.0
    %185 = vmatpush1.msra.mxu0 0.0
    %186 = vmatprep.subr.mxu0 0.0
    %187 = vmatpush1.msra.mxu0 0.0
    %188 = vmatprep.subr.mxu0 0.0
    %189 = vmatpush1.msra.mxu0 0.0
    %190 = vmatprep.subr.mxu0 0.0
    %191 = vmatpush1.msra.mxu0 0.0
    %192 = vmatprep.subr.mxu0 0.0
    %193 = vmatpush1.msra.mxu0 0.0
    %194 = vmatprep.subr.mxu0 0.0
    %195 = vmatpush1.msra.mxu0 0.0
    %196 = vmatprep.mubr.f32.mxu0 0.0
    %197 = vmatmul.mubr.f32.gmra.mrb[0].mxu0 %v129
    %v198 = vpop.f32.mrb[0].mxu0
    %v199 = vadd.f32 0.0, %v198
    %v200 = vpop.f32.mrb[0].mxu0
    %201 = vdwg.mxu0
    %v202 = vadd.f32 %v49, %v199
    %v203 = vmax.f32 %v202, 0.0
    %v204 = vadd.f32 %v50, %v199
    %v205 = vmin.f32 %v204, 0.0
    %v206 = vadd.f32 %v203, %v205
    %s207 = scalar_lea.vmem [#allocation6], 16
    %208 = vst [vmem:[%s207] sm:$0xff] %v206
    %209 = vmatprep.subr.mxu0 0.0
    %210 = vmatpush1.msra.mxu0 %v32
    %211 = vmatprep.subr.mxu0 0.0
    %212 = vmatpush1.msra.mxu0 %v33
    %213 = vmatprep.subr.mxu0 0.0
    %214 = vmatpush1.msra.mxu0 %v34
    %215 = vmatprep.subr.mxu0 0.0
    %216 = vmatpush1.msra.mxu0 %v35
    %217 = vmatprep.subr.mxu0 0.0
    %218 = vmatpush1.msra.mxu0 %v36
    %219 = vmatprep.subr.mxu0 0.0
    %220 = vmatpush1.msra.mxu0 %v37
    %221 = vmatprep.subr.mxu0 0.0
    %222 = vmatpush1.msra.mxu0 %v38
    %223 = vmatprep.subr.mxu0 0.0
    %224 = vmatpush1.msra.mxu0 %v39
    %225 = vmatprep.subr.mxu0 0.0
    %226 = vmatpush1.msra.mxu0 %v40
    %227 = vmatprep.subr.mxu0 0.0
    %228 = vmatpush1.msra.mxu0 %v41
    %229 = vmatprep.subr.mxu0 0.0
    %230 = vmatpush1.msra.mxu0 %v42
    %231 = vmatprep.subr.mxu0 0.0
    %232 = vmatpush1.msra.mxu0 %v43
    %233 = vmatprep.subr.mxu0 0.0
    %234 = vmatpush1.msra.mxu0 %v44
    %235 = vmatprep.subr.mxu0 0.0
    %236 = vmatpush1.msra.mxu0 %v45
    %237 = vmatprep.subr.mxu0 0.0
    %238 = vmatpush1.msra.mxu0 %v46
    %239 = vmatprep.subr.mxu0 0.0
    %240 = vmatpush1.msra.mxu0 %v47
    %241 = vmatprep.subr.mxu0 0.0
    %242 = vmatpush1.msra.mxu0 0.0
    %243 = vmatprep.subr.mxu0 0.0
    %244 = vmatpush1.msra.mxu0 0.0
    %245 = vmatprep.subr.mxu0 0.0
    %246 = vmatpush1.msra.mxu0 0.0
    %247 = vmatprep.subr.mxu0 0.0
    %248 = vmatpush1.msra.mxu0 0.0
    %249 = vmatprep.subr.mxu0 0.0
    %250 = vmatpush1.msra.mxu0 0.0
    %251 = vmatprep.subr.mxu0 0.0
    %252 = vmatpush1.msra.mxu0 0.0
    %253 = vmatprep.subr.mxu0 0.0
    %254 = vmatpush1.msra.mxu0 0.0
    %255 = vmatprep.subr.mxu0 0.0
    %256 = vmatpush1.msra.mxu0 0.0
    %257 = vmatprep.subr.mxu0 0.0
    %258 = vmatpush1.msra.mxu0 0.0
    %259 = vmatprep.subr.mxu0 0.0
    %260 = vmatpush1.msra.mxu0 0.0
    %261 = vmatprep.subr.mxu0 0.0
    %262 = vmatpush1.msra.mxu0 0.0
    %263 = vmatprep.subr.mxu0 0.0
    %264 = vmatpush1.msra.mxu0 0.0
    %265 = vmatprep.subr.mxu0 0.0
    %266 = vmatpush1.msra.mxu0 0.0
    %267 = vmatprep.subr.mxu0 0.0
    %268 = vmatpush1.msra.mxu0 0.0
    %269 = vmatprep.subr.mxu0 0.0
    %270 = vmatpush1.msra.mxu0 0.0
    %271 = vmatprep.subr.mxu0 0.0
    %272 = vmatpush1.msra.mxu0 0.0
    %273 = vmatprep.mubr.f32.mxu0 0.0
    %274 = vmatmul.mubr.f32.gmra.mrb[0].mxu0 %v206
    %v275 = vpop.f32.mrb[0].mxu0
    %v276 = vadd.f32 0.0, %v275
    %v277 = vpop.f32.mrb[0].mxu0
    %278 = vdwg.mxu0
    %v279 = vadd.f32 %v49, %v276
    %v280 = vmax.f32 %v279, 0.0
    %v281 = vadd.f32 %v50, %v276
    %v282 = vmin.f32 %v281, 0.0
    %v283 = vadd.f32 %v280, %v282
    %s284 = scalar_lea.vmem [#allocation6], 24
    %285 = vst [vmem:[%s284] sm:$0xff] %v283
    %286 = vmatprep.subr.mxu0 0.0
    %287 = vmatpush1.msra.mxu0 %v32
    %288 = vmatprep.subr.mxu0 0.0
    %289 = vmatpush1.msra.mxu0 %v33
    %290 = vmatprep.subr.mxu0 0.0
    %291 = vmatpush1.msra.mxu0 %v34
    %292 = vmatprep.subr.mxu0 0.0
    %293 = vmatpush1.msra.mxu0 %v35
    %294 = vmatprep.subr.mxu0 0.0
    %295 = vmatpush1.msra.mxu0 %v36
    %296 = vmatprep.subr.mxu0 0.0
    %297 = vmatpush1.msra.mxu0 %v37
    %298 = vmatprep.subr.mxu0 0.0
    %299 = vmatpush1.msra.mxu0 %v38
    %300 = vmatprep.subr.mxu0 0.0
    %301 = vmatpush1.msra.mxu0 %v39
    %302 = vmatprep.subr.mxu0 0.0
    %303 = vmatpush1.msra.mxu0 %v40
    %304 = vmatprep.subr.mxu0 0.0
    %305 = vmatpush1.msra.mxu0 %v41
    %306 = vmatprep.subr.mxu0 0.0
    %307 = vmatpush1.msra.mxu0 %v42
    %308 = vmatprep.subr.mxu0 0.0
    %309 = vmatpush1.msra.mxu0 %v43
    %310 = vmatprep.subr.mxu0 0.0
    %311 = vmatpush1.msra.mxu0 %v44
    %312 = vmatprep.subr.mxu0 0.0
    %313 = vmatpush1.msra.mxu0 %v45
    %314 = vmatprep.subr.mxu0 0.0
    %315 = vmatpush1.msra.mxu0 %v46
    %316 = vmatprep.subr.mxu0 0.0
    %317 = vmatpush1.msra.mxu0 %v47
    %318 = vmatprep.subr.mxu0 0.0
    %319 = vmatpush1.msra.mxu0 0.0
    %320 = vmatprep.subr.mxu0 0.0
    %321 = vmatpush1.msra.mxu0 0.0
    %322 = vmatprep.subr.mxu0 0.0
    %323 = vmatpush1.msra.mxu0 0.0
    %324 = vmatprep.subr.mxu0 0.0
    %325 = vmatpush1.msra.mxu0 0.0
    %326 = vmatprep.subr.mxu0 0.0
    %327 = vmatpush1.msra.mxu0 0.0
    %328 = vmatprep.subr.mxu0 0.0
    %329 = vmatpush1.msra.mxu0 0.0
    %330 = vmatprep.subr.mxu0 0.0
    %331 = vmatpush1.msra.mxu0 0.0
    %332 = vmatprep.subr.mxu0 0.0
    %333 = vmatpush1.msra.mxu0 0.0
    %334 = vmatprep.subr.mxu0 0.0
    %335 = vmatpush1.msra.mxu0 0.0
    %336 = vmatprep.subr.mxu0 0.0
    %337 = vmatpush1.msra.mxu0 0.0
    %338 = vmatprep.subr.mxu0 0.0
    %339 = vmatpush1.msra.mxu0 0.0
    %340 = vmatprep.subr.mxu0 0.0
    %341 = vmatpush1.msra.mxu0 0.0
    %342 = vmatprep.subr.mxu0 0.0
    %343 = vmatpush1.msra.mxu0 0.0
    %344 = vmatprep.subr.mxu0 0.0
    %345 = vmatpush1.msra.mxu0 0.0
    %346 = vmatprep.subr.mxu0 0.0
    %347 = vmatpush1.msra.mxu0 0.0
    %348 = vmatprep.subr.mxu0 0.0
    %349 = vmatpush1.msra.mxu0 0.0
    %350 = vmatprep.mubr.f32.mxu0 0.0
    %351 = vmatmul.mubr.f32.gmra.mrb[0].mxu0 %v283
    %v352 = vpop.f32.mrb[0].mxu0
    %v353 = vadd.f32 0.0, %v352
    %v354 = vpop.f32.mrb[0].mxu0
    %355 = vdwg.mxu0
    %v356 = vadd.f32 %v49, %v353
    %v357 = vmax.f32 %v356, 0.0
    %v358 = vadd.f32 %v50, %v353
    %v359 = vmin.f32 %v358, 0.0
    %v360 = vadd.f32 %v357, %v359
    %s361 = scalar_lea.vmem [#allocation6], 32
    %362 = vst [vmem:[%s361] sm:$0xff] %v360
    // Predicated region
    $region18: #{_lista_forward_impl.1} parent=1 // pred_check
      _
    $region19: #{_lista_forward_impl.1} parent=1 // pred_check_branch
      %364 = sbr.rel (0) target = $region21
    $region20: #{_lista_forward_impl.1} parent=1 // pred_region
      %s366 = ssub.s32 640, 640
      %367 = vsyncadd [#allocation5], %s366
      %s368 = sshll.u32 [#allocation6], 4
      %s369 = int_to_ptr.vmem [resolvable:$true] %s368
      %374 = dma.vmem_to_hbm [thread:$0]  %s369, 640, %s3, [#allocation5], 128, 128, 8
    $region21: #{_lista_forward_impl.1} parent=1 // pred_fallthru
      _
    // Predicated region
    $region22: #{_lista_forward_impl.1} parent=1 // pred_check
      _
    $region23: #{_lista_forward_impl.1} parent=1 // pred_check_branch
      %376 = sbr.rel (0) target = $region25
    $region24: #{_lista_forward_impl.1} parent=1 // pred_region
      %377 = dma.done [#allocation5], 640
    $region25: #{_lista_forward_impl.1} parent=1 // pred_fallthru
      _
    %378 = vsyncpa [#allocation4], 1
    %379 = vsyncpa [#allocation5], 1

</llo_original>
